<compile_context>
chip_gen: v7x
topology: tpu7x:2x2x1
jax: 0.10.0
libtpu: 0.0.40
codegen_flags: <defaults>
</compile_context>

<pallas_src>
import functools

import jax
import jax.numpy as jnp
from jax import lax
from jax.experimental import pallas as pl
from jax.experimental.pallas import tpu as pltpu


def _round_up(x, m):
    return ((x + m - 1) // m) * m


def _scale_aware_kernel(xl_ref, xh_ref, wp1_ref, wp3_ref, mask_ref, out_ref,
                        *, C, W, K1, K2, SEG, compute_dtype):
    """One block of `bt` images, flattened to lane-dense (C, bt*H*W) tiles."""
    xl = xl_ref[...]                        # (C, Nt) f32
    xh = xh_ref[...]                        # (C, Nt) f32
    mask = mask_ref[...]                    # (9, Nt) f32 per-tap border mask

    def mm(a, b):
        if compute_dtype != jnp.float32:
            a = a.astype(compute_dtype)
            b = b.astype(compute_dtype)
        return jnp.dot(a, b, preferred_element_type=jnp.float32)

    # --- 1x1 conv over concat([xl, xh]) folded into two matmuls (f32 bias+relu)
    wp1 = wp1_ref[...]                      # (Cp, 2C+1) f32
    w1l = wp1[:, :C]
    w1h = wp1[:, C:2 * C]
    b1 = wp1[:, 2 * C:2 * C + 1]
    f1 = jnp.maximum(mm(w1l, xl) + mm(w1h, xh) + b1, 0.0)    # (Cp, Nt); pad rows 0

    # --- im2col: 9 statically-rotated taps, border mask fused per tap.
    #     Input rows are already padded to a sublane multiple (zero rows), so
    #     each tap chunk is sublane-aligned and the concat is pure copies.
    def im2col(f):                          # f: (rows_padded, Nt)
        taps = []
        for t in range(9):
            dy, dx = t // 3 - 1, t % 3 - 1
            off = dy * W + dx
            if off == 0:
                taps.append(f)              # centre tap: no shift, no mask
            else:
                taps.append(jnp.roll(f, -off, axis=1) * mask[t:t + 1, :])
        return jnp.concatenate(taps, axis=0)

    wp3 = wp3_ref[...]                      # (Chp, 2*SEG+2) f32
    w3a = wp3[:, :K1]                       # (Chp, 9*Cp)
    w3b = wp3[:, SEG:SEG + K2]              # (Chp, 9*Chp); only rows 0..1 non-zero
    b3a = wp3[:, 2 * SEG:2 * SEG + 1]       # (Chp, 1)
    b3b = wp3[:, 2 * SEG + 1:2 * SEG + 2]   # (Chp, 1)

    # --- 3x3 conv #1 (C -> C//2, output rows padded) — one matmul, K = 9*Cp
    f2 = jnp.maximum(mm(w3a, im2col(f1)) + b3a, 0.0)          # (Chp, Nt)

    # --- 3x3 conv #2 (C//2 -> 2; extra output rows are zero padding)
    logits = mm(w3b, im2col(f2)) + b3b                         # (Chp, Nt)

    # --- 2-way softmax == sigmoid of the logit difference; fused blend:
    #     out = a0*xl + a1*xh = xh + a0*(xl - xh)
    a0 = 1.0 / (1.0 + jnp.exp(logits[1:2, :] - logits[0:1, :]))   # (1, Nt)
    out_ref[...] = (xh + a0 * (xl - xh)).astype(out_ref.dtype)


def _pick_images_per_block(B, HW, target_lanes=2048):
    """Biggest bt up to ~target_lanes lanes/step, keeping >=2 blocks if B>=2."""
    bt = max(1, min(B, max(1, target_lanes // HW)))
    while bt > 1 and (B % bt != 0 or B // bt < 2):
        bt -= 1
    return bt


def scale_aware_pallas(x_l, x_h, params, *, matmul_dtype=jnp.float32,
                       images_per_block=None):
    """x_l, x_h: NCHW float32 arrays of identical shape (B, C, H, W).

    matmul_dtype: MXU operand dtype.  Keep float32 on v5e (no bf16 VPU/EUP and
    the kernel is not MXU-bound); bf16 is an opt-in for v6e/v7x.
    """
    B, C, H, W = x_l.shape
    HW = H * W
    Ch = C // 2
    Cp = _round_up(C, 8)            # sublane-aligned channel blocks (f32)
    Chp = _round_up(Ch, 8)
    K1, K2 = 9 * Cp, 9 * Chp
    SEG = _round_up(max(K1, K2), 128)

    bt = images_per_block or _pick_images_per_block(B, HW)
    assert B % bt == 0, "images_per_block must divide the batch"
    Nt = bt * HW                    # lanes per grid step
    N = B * HW

    # NCHW -> lane-dense (C, B*HW).  Layout plumbing only; lets every matmul
    # and every output store run with N = bt*HW lanes.
    xl = x_l.reshape(B, C, HW).transpose(1, 0, 2).reshape(C, N)
    xh = x_h.reshape(B, C, HW).transpose(1, 0, 2).reshape(C, N)

    # --- packed 1x1-conv constants: [w1_l | w1_h | b1], output rows padded ---
    w1 = params["w1"]                                    # (C, 2C)
    wpack1 = jnp.zeros((Cp, 2 * C + 1), jnp.float32)
    wpack1 = wpack1.at[:C, :C].set(w1[:, :C])
    wpack1 = wpack1.at[:C, C:2 * C].set(w1[:, C:])
    wpack1 = wpack1.at[:C, 2 * C].set(params["b1"])

    # --- 3x3 weights as (out_pad, 9*cin_pad) matmul matrices.  Contraction
    #     index is tap*cin_pad + cin, so every tap block is sublane-aligned;
    #     the padding columns/rows are zero (free on the MXU).
    def conv3_matrix(w, out_pad, cin, cin_pad):
        o = w.shape[0]
        m = jnp.transpose(w, (0, 2, 3, 1)).reshape(o, 9, cin)
        m = jnp.pad(m, ((0, out_pad - o), (0, 0), (0, cin_pad - cin)))
        return m.reshape(out_pad, 9 * cin_pad)

    w3a_m = conv3_matrix(params["w3a"], Chp, C, Cp)      # (Chp, K1)
    w3b_m = conv3_matrix(params["w3b"], Chp, Ch, Chp)    # (Chp, K2)
    b3a_p = jnp.zeros((Chp,), jnp.float32).at[:Ch].set(params["b3a"])
    b3b_p = jnp.zeros((Chp,), jnp.float32).at[:2].set(params["b3b"])

    # Pack both 3x3 convs into one constant; weight sections 128-lane aligned.
    wpack3 = jnp.zeros((Chp, 2 * SEG + 2), jnp.float32)
    wpack3 = wpack3.at[:, :K1].set(w3a_m)
    wpack3 = wpack3.at[:, SEG:SEG + K2].set(w3b_m)
    wpack3 = wpack3.at[:, 2 * SEG].set(b3a_p)
    wpack3 = wpack3.at[:, 2 * SEG + 1].set(b3b_p)

    # --- compact per-tap validity mask (column + row + inter-image borders) ---
    pix = jnp.arange(HW, dtype=jnp.int32)
    col = pix % W
    row = pix // W
    tap_rows = []
    for t in range(9):
        dy, dx = t // 3 - 1, t % 3 - 1
        ok = (col + dx >= 0) & (col + dx < W) & (row + dy >= 0) & (row + dy < H)
        tap_rows.append(ok)
    tap_mask = jnp.stack(tap_rows).astype(jnp.float32)   # (9, HW)
    tap_mask = jnp.tile(tap_mask, (1, bt))               # (9, Nt)

    img_spec = pl.BlockSpec((C, Nt), lambda i: (0, i))

    def const_spec(arr):
        return pl.BlockSpec(arr.shape, lambda i: (0, 0))

    kernel = functools.partial(_scale_aware_kernel, C=C, W=W, K1=K1, K2=K2,
                               SEG=SEG, compute_dtype=matmul_dtype)

    flops = 2 * N * (2 * Cp * C + Chp * K1 + Chp * K2)
    bytes_accessed = 4 * (3 * C * N + tap_mask.size + wpack1.size + wpack3.size)
    cost = pl.CostEstimate(flops=flops, transcendentals=N,
                           bytes_accessed=bytes_accessed)

    out = pl.pallas_call(
        kernel,
        out_shape=jax.ShapeDtypeStruct((C, N), x_l.dtype),
        grid_spec=pltpu.PrefetchScalarGridSpec(
            num_scalar_prefetch=0,
            grid=(B // bt,),
            in_specs=[
                img_spec,                   # x_l  (C, B*HW)
                img_spec,                   # x_h
                const_spec(wpack1),         # (Cp, 2C+1)
                const_spec(wpack3),         # (Chp, 2*SEG+2)
                const_spec(tap_mask),       # (9, Nt)
            ],
            out_specs=img_spec,
        ),
        compiler_params=pltpu.CompilerParams(
            dimension_semantics=("parallel",)),
        cost_estimate=cost,
    )(xl, xh, wpack1, wpack3, tap_mask)

    return out.reshape(C, B, HW).transpose(1, 0, 2).reshape(B, C, H, W)


def init_params(key, C):
    """Synthetic weights in PyTorch-style layouts (conv: OIHW, bias: (O,))."""
    Ch = C // 2
    ks = jax.random.split(key, 6)
    s = 0.1
    return {
        "w1":  s * jax.random.normal(ks[0], (C, 2 * C), jnp.float32),
        "b1":  s * jax.random.normal(ks[1], (C,), jnp.float32),
        "w3a": s * jax.random.normal(ks[2], (Ch, C, 3, 3), jnp.float32),
        "b3a": s * jax.random.normal(ks[3], (Ch,), jnp.float32),
        "w3b": s * jax.random.normal(ks[4], (2, Ch, 3, 3), jnp.float32),
        "b3b": s * jax.random.normal(ks[5], (2,), jnp.float32),
    }


def scale_aware_reference(x_l, x_h, params):
    """Pure-JAX reference (lax convs, NCHW) mirroring the PyTorch forward."""
    C = x_l.shape[1]

    def conv(x, w, b, pad):
        y = lax.conv_general_dilated(
            x, w, window_strides=(1, 1), padding=[(pad, pad), (pad, pad)],
            dimension_numbers=("NCHW", "OIHW", "NCHW"))
        return y + b.reshape(1, -1, 1, 1)

    feat = jnp.concatenate([x_l, x_h], axis=1)
    feat = jax.nn.relu(conv(feat, params["w1"].reshape(C, 2 * C, 1, 1),
                            params["b1"], pad=0))
    feat = jax.nn.relu(conv(feat, params["w3a"], params["b3a"], pad=1))
    att = jax.nn.softmax(conv(feat, params["w3b"], params["b3b"], pad=1), axis=1)
    return att[:, 0:1] * x_l + att[:, 1:2] * x_h


if __name__ == "__main__":
    B, C, H, W = 2, 4, 16, 16
    key = jax.random.PRNGKey(0)
    kx, kp = jax.random.split(key)
    kxl, kxh = jax.random.split(kx)

    x_l = jax.random.normal(kxl, (B, C, H, W), jnp.float32)
    x_h = jax.random.normal(kxh, (B, C, H, W), jnp.float32)
    params = init_params(kp, C)

    ref = jax.block_until_ready(scale_aware_reference(x_l, x_h, params))

    # Default path: f32 MXU, auto bt (=1 here -> 2 parallel grid blocks).
    out = jax.block_until_ready(scale_aware_pallas(x_l, x_h, params))
    assert out.shape == (B, C, H, W)
    err = float(jnp.max(jnp.abs(out - ref)))
    assert jnp.allclose(out, ref, atol=1e-4, rtol=1e-4), err

    # Multi-image-per-step path (2 images in one grid step, N = 512 lanes);
    # exercises the inter-image border masking.
    out_b2 = jax.block_until_ready(
        scale_aware_pallas(x_l, x_h, params, images_per_block=2))
    err_b2 = float(jnp.max(jnp.abs(out_b2 - ref)))
    assert jnp.allclose(out_b2, ref, atol=1e-4, rtol=1e-4), err_b2

    # bf16-MXU path (v6e/v7x): f32 accumulation + f32 elementwise, looser tol.
    out_bf16 = jax.block_until_ready(
        scale_aware_pallas(x_l, x_h, params, matmul_dtype=jnp.bfloat16))
    err_bf16 = float(jnp.max(jnp.abs(out_bf16 - ref)))
    assert jnp.allclose(out_bf16, ref, atol=5e-2, rtol=5e-2), err_bf16

    print("KERNEL_OK")
</pallas_src>

<mosaic_0001>
module attributes {stable_mosaic.version = 11 : i64} {
  func.func @_scale_aware_kernel(%arg0: i32, %arg1: memref<4x256xf32, #tpu.memory_space<vmem>>, %arg2: memref<4x256xf32, #tpu.memory_space<vmem>>, %arg3: memref<8x9xf32, #tpu.memory_space<vmem>>, %arg4: memref<8x258xf32, #tpu.memory_space<vmem>>, %arg5: memref<9x256xf32, #tpu.memory_space<vmem>>, %arg6: memref<4x256xf32, #tpu.memory_space<vmem>>) attributes {dimension_semantics = [#tpu.dimension_semantics<parallel>], iteration_bounds = array<i64: 2>, scalar_prefetch = 0 : i64, scratch_operands = 0 : i64, tpu.core_type = #tpu.core_type<tc>, window_params = [{transform_indices = @transform_0, window_bounds = array<i64: 4, 256>}, {transform_indices = @transform_1, window_bounds = array<i64: 4, 256>}, {pipeline_mode = #tpu.pipeline_mode<synchronous>, transform_indices = @transform_2, window_bounds = array<i64: 8, 9>}, {pipeline_mode = #tpu.pipeline_mode<synchronous>, transform_indices = @transform_3, window_bounds = array<i64: 8, 258>}, {pipeline_mode = #tpu.pipeline_mode<synchronous>, transform_indices = @transform_4, window_bounds = array<i64: 9, 256>}, {transform_indices = @transform_5, window_bounds = array<i64: 4, 256>}]} {
    %c0 = arith.constant 0 : index
    %c0_0 = arith.constant 0 : index
    %0 = vector.load %arg1[%c0, %c0_0] : memref<4x256xf32, #tpu.memory_space<vmem>>, vector<4x256xf32>
    %c0_1 = arith.constant 0 : index
    %c0_2 = arith.constant 0 : index
    %1 = vector.load %arg2[%c0_1, %c0_2] : memref<4x256xf32, #tpu.memory_space<vmem>>, vector<4x256xf32>
    %c0_3 = arith.constant 0 : index
    %c0_4 = arith.constant 0 : index
    %2 = vector.load %arg5[%c0_3, %c0_4] : memref<9x256xf32, #tpu.memory_space<vmem>>, vector<9x256xf32>
    %c0_5 = arith.constant 0 : index
    %c0_6 = arith.constant 0 : index
    %3 = vector.load %arg3[%c0_5, %c0_6] : memref<8x9xf32, #tpu.memory_space<vmem>>, vector<8x9xf32>
    %4 = vector.extract_strided_slice %3 {offsets = [0, 0], sizes = [8, 4], strides = [1, 1]} : vector<8x9xf32> to vector<8x4xf32>
    %5 = vector.extract_strided_slice %3 {offsets = [0, 4], sizes = [8, 4], strides = [1, 1]} : vector<8x9xf32> to vector<8x4xf32>
    %6 = vector.extract_strided_slice %3 {offsets = [0, 8], sizes = [8, 1], strides = [1, 1]} : vector<8x9xf32> to vector<8x1xf32>
    %cst = arith.constant dense<0.000000e+00> : vector<8x256xf32>
    %7 = tpu.matmul %4, %0, %cst {dimension_numbers = #tpu.dot_dimension_numbers<[1], [0], [0], [1], [0, 0, 1, 1], [], []>} : vector<8x4xf32>, vector<4x256xf32>, vector<8x256xf32> -> vector<8x256xf32>
    %cst_7 = arith.constant dense<0.000000e+00> : vector<8x256xf32>
    %8 = tpu.matmul %5, %1, %cst_7 {dimension_numbers = #tpu.dot_dimension_numbers<[1], [0], [0], [1], [0, 0, 1, 1], [], []>} : vector<8x4xf32>, vector<4x256xf32>, vector<8x256xf32> -> vector<8x256xf32>
    %9 = arith.addf %7, %8 : vector<8x256xf32>
    %10 = vector.broadcast %6 : vector<8x1xf32> to vector<8x256xf32>
    %11 = arith.addf %9, %10 : vector<8x256xf32>
    %cst_8 = arith.constant 0.000000e+00 : f32
    %12 = vector.broadcast %cst_8 : f32 to vector<8x256xf32>
    %13 = arith.maximumf %11, %12 : vector<8x256xf32>
    %c0_9 = arith.constant 0 : index
    %c0_10 = arith.constant 0 : index
    %14 = vector.load %arg4[%c0_9, %c0_10] : memref<8x258xf32, #tpu.memory_space<vmem>>, vector<8x258xf32>
    %15 = vector.extract_strided_slice %14 {offsets = [0, 0], sizes = [8, 72], strides = [1, 1]} : vector<8x258xf32> to vector<8x72xf32>
    %16 = vector.extract_strided_slice %14 {offsets = [0, 128], sizes = [8, 72], strides = [1, 1]} : vector<8x258xf32> to vector<8x72xf32>
    %17 = vector.extract_strided_slice %14 {offsets = [0, 256], sizes = [8, 1], strides = [1, 1]} : vector<8x258xf32> to vector<8x1xf32>
    %18 = vector.extract_strided_slice %14 {offsets = [0, 257], sizes = [8, 1], strides = [1, 1]} : vector<8x258xf32> to vector<8x1xf32>
    %19 = vector.extract_strided_slice %13 {offsets = [0, 239], sizes = [8, 17], strides = [1, 1]} : vector<8x256xf32> to vector<8x17xf32>
    %20 = vector.extract_strided_slice %13 {offsets = [0, 0], sizes = [8, 239], strides = [1, 1]} : vector<8x256xf32> to vector<8x239xf32>
    %21 = tpu.concatenate %19, %20 in 1 : vector<8x17xf32>, vector<8x239xf32> -> vector<8x256xf32>
    %22 = vector.extract_strided_slice %2 {offsets = [0, 0], sizes = [1, 256], strides = [1, 1]} : vector<9x256xf32> to vector<1x256xf32>
    %23 = vector.broadcast %22 : vector<1x256xf32> to vector<8x256xf32>
    %24 = arith.mulf %21, %23 : vector<8x256xf32>
    %25 = vector.extract_strided_slice %13 {offsets = [0, 240], sizes = [8, 16], strides = [1, 1]} : vector<8x256xf32> to vector<8x16xf32>
    %26 = vector.extract_strided_slice %13 {offsets = [0, 0], sizes = [8, 240], strides = [1, 1]} : vector<8x256xf32> to vector<8x240xf32>
    %27 = tpu.concatenate %25, %26 in 1 : vector<8x16xf32>, vector<8x240xf32> -> vector<8x256xf32>
    %28 = vector.extract_strided_slice %2 {offsets = [1, 0], sizes = [1, 256], strides = [1, 1]} : vector<9x256xf32> to vector<1x256xf32>
    %29 = vector.broadcast %28 : vector<1x256xf32> to vector<8x256xf32>
    %30 = arith.mulf %27, %29 : vector<8x256xf32>
    %31 = vector.extract_strided_slice %13 {offsets = [0, 241], sizes = [8, 15], strides = [1, 1]} : vector<8x256xf32> to vector<8x15xf32>
    %32 = vector.extract_strided_slice %13 {offsets = [0, 0], sizes = [8, 241], strides = [1, 1]} : vector<8x256xf32> to vector<8x241xf32>
    %33 = tpu.concatenate %31, %32 in 1 : vector<8x15xf32>, vector<8x241xf32> -> vector<8x256xf32>
    %34 = vector.extract_strided_slice %2 {offsets = [2, 0], sizes = [1, 256], strides = [1, 1]} : vector<9x256xf32> to vector<1x256xf32>
    %35 = vector.broadcast %34 : vector<1x256xf32> to vector<8x256xf32>
    %36 = arith.mulf %33, %35 : vector<8x256xf32>
    %37 = vector.extract_strided_slice %13 {offsets = [0, 255], sizes = [8, 1], strides = [1, 1]} : vector<8x256xf32> to vector<8x1xf32>
    %38 = vector.extract_strided_slice %13 {offsets = [0, 0], sizes = [8, 255], strides = [1, 1]} : vector<8x256xf32> to vector<8x255xf32>
    %39 = tpu.concatenate %37, %38 in 1 : vector<8x1xf32>, vector<8x255xf32> -> vector<8x256xf32>
    %40 = vector.extract_strided_slice %2 {offsets = [3, 0], sizes = [1, 256], strides = [1, 1]} : vector<9x256xf32> to vector<1x256xf32>
    %41 = vector.broadcast %40 : vector<1x256xf32> to vector<8x256xf32>
    %42 = arith.mulf %39, %41 : vector<8x256xf32>
    %43 = vector.extract_strided_slice %13 {offsets = [0, 1], sizes = [8, 255], strides = [1, 1]} : vector<8x256xf32> to vector<8x255xf32>
    %44 = vector.extract_strided_slice %13 {offsets = [0, 0], sizes = [8, 1], strides = [1, 1]} : vector<8x256xf32> to vector<8x1xf32>
    %45 = tpu.concatenate %43, %44 in 1 : vector<8x255xf32>, vector<8x1xf32> -> vector<8x256xf32>
    %46 = vector.extract_strided_slice %2 {offsets = [5, 0], sizes = [1, 256], strides = [1, 1]} : vector<9x256xf32> to vector<1x256xf32>
    %47 = vector.broadcast %46 : vector<1x256xf32> to vector<8x256xf32>
    %48 = arith.mulf %45, %47 : vector<8x256xf32>
    %49 = vector.extract_strided_slice %13 {offsets = [0, 15], sizes = [8, 241], strides = [1, 1]} : vector<8x256xf32> to vector<8x241xf32>
    %50 = vector.extract_strided_slice %13 {offsets = [0, 0], sizes = [8, 15], strides = [1, 1]} : vector<8x256xf32> to vector<8x15xf32>
    %51 = tpu.concatenate %49, %50 in 1 : vector<8x241xf32>, vector<8x15xf32> -> vector<8x256xf32>
    %52 = vector.extract_strided_slice %2 {offsets = [6, 0], sizes = [1, 256], strides = [1, 1]} : vector<9x256xf32> to vector<1x256xf32>
    %53 = vector.broadcast %52 : vector<1x256xf32> to vector<8x256xf32>
    %54 = arith.mulf %51, %53 : vector<8x256xf32>
    %55 = vector.extract_strided_slice %13 {offsets = [0, 16], sizes = [8, 240], strides = [1, 1]} : vector<8x256xf32> to vector<8x240xf32>
    %56 = vector.extract_strided_slice %13 {offsets = [0, 0], sizes = [8, 16], strides = [1, 1]} : vector<8x256xf32> to vector<8x16xf32>
    %57 = tpu.concatenate %55, %56 in 1 : vector<8x240xf32>, vector<8x16xf32> -> vector<8x256xf32>
    %58 = vector.extract_strided_slice %2 {offsets = [7, 0], sizes = [1, 256], strides = [1, 1]} : vector<9x256xf32> to vector<1x256xf32>
    %59 = vector.broadcast %58 : vector<1x256xf32> to vector<8x256xf32>
    %60 = arith.mulf %57, %59 : vector<8x256xf32>
    %61 = vector.extract_strided_slice %13 {offsets = [0, 17], sizes = [8, 239], strides = [1, 1]} : vector<8x256xf32> to vector<8x239xf32>
    %62 = vector.extract_strided_slice %13 {offsets = [0, 0], sizes = [8, 17], strides = [1, 1]} : vector<8x256xf32> to vector<8x17xf32>
    %63 = tpu.concatenate %61, %62 in 1 : vector<8x239xf32>, vector<8x17xf32> -> vector<8x256xf32>
    %64 = vector.extract_strided_slice %2 {offsets = [8, 0], sizes = [1, 256], strides = [1, 1]} : vector<9x256xf32> to vector<1x256xf32>
    %65 = vector.broadcast %64 : vector<1x256xf32> to vector<8x256xf32>
    %66 = arith.mulf %63, %65 : vector<8x256xf32>
    %67 = tpu.concatenate %24, %30, %36, %42, %13, %48, %54, %60, %66 in 0 : vector<8x256xf32>, vector<8x256xf32>, vector<8x256xf32>, vector<8x256xf32>, vector<8x256xf32>, vector<8x256xf32>, vector<8x256xf32>, vector<8x256xf32>, vector<8x256xf32> -> vector<72x256xf32>
    %cst_11 = arith.constant dense<0.000000e+00> : vector<8x256xf32>
    %68 = tpu.matmul %15, %67, %cst_11 {dimension_numbers = #tpu.dot_dimension_numbers<[1], [0], [0], [1], [0, 0, 1, 1], [], []>} : vector<8x72xf32>, vector<72x256xf32>, vector<8x256xf32> -> vector<8x256xf32>
    %69 = vector.broadcast %17 : vector<8x1xf32> to vector<8x256xf32>
    %70 = arith.addf %68, %69 : vector<8x256xf32>
    %cst_12 = arith.constant 0.000000e+00 : f32
    %71 = vector.broadcast %cst_12 : f32 to vector<8x256xf32>
    %72 = arith.maximumf %70, %71 : vector<8x256xf32>
    %73 = vector.extract_strided_slice %72 {offsets = [0, 239], sizes = [8, 17], strides = [1, 1]} : vector<8x256xf32> to vector<8x17xf32>
    %74 = vector.extract_strided_slice %72 {offsets = [0, 0], sizes = [8, 239], strides = [1, 1]} : vector<8x256xf32> to vector<8x239xf32>
    %75 = tpu.concatenate %73, %74 in 1 : vector<8x17xf32>, vector<8x239xf32> -> vector<8x256xf32>
    %76 = vector.extract_strided_slice %2 {offsets = [0, 0], sizes = [1, 256], strides = [1, 1]} : vector<9x256xf32> to vector<1x256xf32>
    %77 = vector.broadcast %76 : vector<1x256xf32> to vector<8x256xf32>
    %78 = arith.mulf %75, %77 : vector<8x256xf32>
    %79 = vector.extract_strided_slice %72 {offsets = [0, 240], sizes = [8, 16], strides = [1, 1]} : vector<8x256xf32> to vector<8x16xf32>
    %80 = vector.extract_strided_slice %72 {offsets = [0, 0], sizes = [8, 240], strides = [1, 1]} : vector<8x256xf32> to vector<8x240xf32>
    %81 = tpu.concatenate %79, %80 in 1 : vector<8x16xf32>, vector<8x240xf32> -> vector<8x256xf32>
    %82 = vector.extract_strided_slice %2 {offsets = [1, 0], sizes = [1, 256], strides = [1, 1]} : vector<9x256xf32> to vector<1x256xf32>
    %83 = vector.broadcast %82 : vector<1x256xf32> to vector<8x256xf32>
    %84 = arith.mulf %81, %83 : vector<8x256xf32>
    %85 = vector.extract_strided_slice %72 {offsets = [0, 241], sizes = [8, 15], strides = [1, 1]} : vector<8x256xf32> to vector<8x15xf32>
    %86 = vector.extract_strided_slice %72 {offsets = [0, 0], sizes = [8, 241], strides = [1, 1]} : vector<8x256xf32> to vector<8x241xf32>
    %87 = tpu.concatenate %85, %86 in 1 : vector<8x15xf32>, vector<8x241xf32> -> vector<8x256xf32>
    %88 = vector.extract_strided_slice %2 {offsets = [2, 0], sizes = [1, 256], strides = [1, 1]} : vector<9x256xf32> to vector<1x256xf32>
    %89 = vector.broadcast %88 : vector<1x256xf32> to vector<8x256xf32>
    %90 = arith.mulf %87, %89 : vector<8x256xf32>
    %91 = vector.extract_strided_slice %72 {offsets = [0, 255], sizes = [8, 1], strides = [1, 1]} : vector<8x256xf32> to vector<8x1xf32>
    %92 = vector.extract_strided_slice %72 {offsets = [0, 0], sizes = [8, 255], strides = [1, 1]} : vector<8x256xf32> to vector<8x255xf32>
    %93 = tpu.concatenate %91, %92 in 1 : vector<8x1xf32>, vector<8x255xf32> -> vector<8x256xf32>
    %94 = vector.extract_strided_slice %2 {offsets = [3, 0], sizes = [1, 256], strides = [1, 1]} : vector<9x256xf32> to vector<1x256xf32>
    %95 = vector.broadcast %94 : vector<1x256xf32> to vector<8x256xf32>
    %96 = arith.mulf %93, %95 : vector<8x256xf32>
    %97 = vector.extract_strided_slice %72 {offsets = [0, 1], sizes = [8, 255], strides = [1, 1]} : vector<8x256xf32> to vector<8x255xf32>
    %98 = vector.extract_strided_slice %72 {offsets = [0, 0], sizes = [8, 1], strides = [1, 1]} : vector<8x256xf32> to vector<8x1xf32>
    %99 = tpu.concatenate %97, %98 in 1 : vector<8x255xf32>, vector<8x1xf32> -> vector<8x256xf32>
    %100 = vector.extract_strided_slice %2 {offsets = [5, 0], sizes = [1, 256], strides = [1, 1]} : vector<9x256xf32> to vector<1x256xf32>
    %101 = vector.broadcast %100 : vector<1x256xf32> to vector<8x256xf32>
    %102 = arith.mulf %99, %101 : vector<8x256xf32>
    %103 = vector.extract_strided_slice %72 {offsets = [0, 15], sizes = [8, 241], strides = [1, 1]} : vector<8x256xf32> to vector<8x241xf32>
    %104 = vector.extract_strided_slice %72 {offsets = [0, 0], sizes = [8, 15], strides = [1, 1]} : vector<8x256xf32> to vector<8x15xf32>
    %105 = tpu.concatenate %103, %104 in 1 : vector<8x241xf32>, vector<8x15xf32> -> vector<8x256xf32>
    %106 = vector.extract_strided_slice %2 {offsets = [6, 0], sizes = [1, 256], strides = [1, 1]} : vector<9x256xf32> to vector<1x256xf32>
    %107 = vector.broadcast %106 : vector<1x256xf32> to vector<8x256xf32>
    %108 = arith.mulf %105, %107 : vector<8x256xf32>
    %109 = vector.extract_strided_slice %72 {offsets = [0, 16], sizes = [8, 240], strides = [1, 1]} : vector<8x256xf32> to vector<8x240xf32>
    %110 = vector.extract_strided_slice %72 {offsets = [0, 0], sizes = [8, 16], strides = [1, 1]} : vector<8x256xf32> to vector<8x16xf32>
    %111 = tpu.concatenate %109, %110 in 1 : vector<8x240xf32>, vector<8x16xf32> -> vector<8x256xf32>
    %112 = vector.extract_strided_slice %2 {offsets = [7, 0], sizes = [1, 256], strides = [1, 1]} : vector<9x256xf32> to vector<1x256xf32>
    %113 = vector.broadcast %112 : vector<1x256xf32> to vector<8x256xf32>
    %114 = arith.mulf %111, %113 : vector<8x256xf32>
    %115 = vector.extract_strided_slice %72 {offsets = [0, 17], sizes = [8, 239], strides = [1, 1]} : vector<8x256xf32> to vector<8x239xf32>
    %116 = vector.extract_strided_slice %72 {offsets = [0, 0], sizes = [8, 17], strides = [1, 1]} : vector<8x256xf32> to vector<8x17xf32>
    %117 = tpu.concatenate %115, %116 in 1 : vector<8x239xf32>, vector<8x17xf32> -> vector<8x256xf32>
    %118 = vector.extract_strided_slice %2 {offsets = [8, 0], sizes = [1, 256], strides = [1, 1]} : vector<9x256xf32> to vector<1x256xf32>
    %119 = vector.broadcast %118 : vector<1x256xf32> to vector<8x256xf32>
    %120 = arith.mulf %117, %119 : vector<8x256xf32>
    %121 = tpu.concatenate %78, %84, %90, %96, %72, %102, %108, %114, %120 in 0 : vector<8x256xf32>, vector<8x256xf32>, vector<8x256xf32>, vector<8x256xf32>, vector<8x256xf32>, vector<8x256xf32>, vector<8x256xf32>, vector<8x256xf32>, vector<8x256xf32> -> vector<72x256xf32>
    %cst_13 = arith.constant dense<0.000000e+00> : vector<8x256xf32>
    %122 = tpu.matmul %16, %121, %cst_13 {dimension_numbers = #tpu.dot_dimension_numbers<[1], [0], [0], [1], [0, 0, 1, 1], [], []>} : vector<8x72xf32>, vector<72x256xf32>, vector<8x256xf32> -> vector<8x256xf32>
    %123 = vector.broadcast %18 : vector<8x1xf32> to vector<8x256xf32>
    %124 = arith.addf %122, %123 : vector<8x256xf32>
    %125 = vector.extract_strided_slice %124 {offsets = [1, 0], sizes = [1, 256], strides = [1, 1]} : vector<8x256xf32> to vector<1x256xf32>
    %126 = vector.extract_strided_slice %124 {offsets = [0, 0], sizes = [1, 256], strides = [1, 1]} : vector<8x256xf32> to vector<1x256xf32>
    %127 = arith.subf %125, %126 : vector<1x256xf32>
    %128 = math.exp %127 : vector<1x256xf32>
    %cst_14 = arith.constant 1.000000e+00 : f32
    %129 = vector.broadcast %cst_14 : f32 to vector<1x256xf32>
    %130 = arith.addf %129, %128 : vector<1x256xf32>
    %cst_15 = arith.constant 1.000000e+00 : f32
    %131 = vector.broadcast %cst_15 : f32 to vector<1x256xf32>
    %132 = arith.divf %131, %130 : vector<1x256xf32>
    %133 = arith.subf %0, %1 : vector<4x256xf32>
    %134 = vector.broadcast %132 : vector<1x256xf32> to vector<4x256xf32>
    %135 = arith.mulf %134, %133 : vector<4x256xf32>
    %136 = arith.addf %1, %135 : vector<4x256xf32>
    %c0_16 = arith.constant 0 : index
    %c0_17 = arith.constant 0 : index
    %137 = vector.load %arg6[%c0_16, %c0_17] : memref<4x256xf32, #tpu.memory_space<vmem>>, vector<4x256xf32>
    tpu.vector_store %arg6[%c0_16, %c0_17], %136 {strides = array<i32>} : memref<4x256xf32, #tpu.memory_space<vmem>>, vector<4x256xf32>,
    return
  }
  func.func @transform_0(%arg0: i32) -> (i32, i32) {
    %c0_i32 = arith.constant 0 : i32
    %c0_i32_0 = arith.constant 0 : i32
    return %c0_i32, %arg0 : i32, i32
  }
  func.func @transform_1(%arg0: i32) -> (i32, i32) {
    %c0_i32 = arith.constant 0 : i32
    %c0_i32_0 = arith.constant 0 : i32
    return %c0_i32, %arg0 : i32, i32
  }
  func.func @transform_2(%arg0: i32) -> (i32, i32) {
    %c0_i32 = arith.constant 0 : i32
    %c0_i32_0 = arith.constant 0 : i32
    %c0_i32_1 = arith.constant 0 : i32
    return %c0_i32, %c0_i32_0 : i32, i32
  }
  func.func @transform_3(%arg0: i32) -> (i32, i32) {
    %c0_i32 = arith.constant 0 : i32
    %c0_i32_0 = arith.constant 0 : i32
    %c0_i32_1 = arith.constant 0 : i32
    return %c0_i32, %c0_i32_0 : i32, i32
  }
  func.func @transform_4(%arg0: i32) -> (i32, i32) {
    %c0_i32 = arith.constant 0 : i32
    %c0_i32_0 = arith.constant 0 : i32
    %c0_i32_1 = arith.constant 0 : i32
    return %c0_i32, %c0_i32_0 : i32, i32
  }
  func.func @transform_5(%arg0: i32) -> (i32, i32) {
    %c0_i32 = arith.constant 0 : i32
    %c0_i32_0 = arith.constant 0 : i32
    return %c0_i32, %arg0 : i32, i32
  }
}

</mosaic_0001>

<llo_original>
// kernel: tpu_custom_call.1
$region0: #{tpu_custom_call.1}
  #allocation0 [shape = 'u32[]', space=smem, size = 0x4, offset = 0x4, fixed_abs, tag = 'smem constant byte address 0x4 - core index']
  #allocation1 [shape = 'u32[144,128]{1,0:T(1,128)}', space=vmem, size = 0x12000, scoped, tag = 'internal scratch']
  %s0 = inlined_call_operand.hbm [shape: f32[4,512], index: 0, kind: input, shape index: {}]
  %s1 = inlined_call_operand.hbm [shape: f32[4,512], index: 1, kind: input, shape index: {}]
  %s2 = inlined_call_operand.hbm [shape: f32[8,9], index: 2, kind: input, shape index: {}]
  %s3 = inlined_call_operand.hbm [shape: f32[8,258], index: 3, kind: input, shape index: {}]
  %s4 = inlined_call_operand.hbm [shape: f32[9,256], index: 4, kind: input, shape index: {}]
  %s5 = inlined_call_operand.hbm [shape: f32[4,512], index: 5, kind: output, shape index: {}]
  %s6 = sld [smem:[#allocation0]]
  $region73: #{tpu_custom_call.1} parent=0
    _
  %s8 = ssub.s32 1, %s6
  %s9 = scalar_select 0, %s8, %s6
  $region1: #{tpu_custom_call.1} parent=0
    #allocation2 [shape = 'u8[8192]{0}', space=vmem, size = 0x2000, scoped, tag = 'input window, operand 0']
    #allocation3 [shape = 's32[2]{0}', space=sflag, size = 0x8, scoped, tag = 'scoped memory for tpu_custom_call.1']
    #allocation4 [shape = 's32[2]{0}', space=sflag, size = 0x8, scoped, tag = 'scoped memory for tpu_custom_call.1']
    #allocation5 [shape = 'u8[8192]{0}', space=vmem, size = 0x2000, scoped, tag = 'input window, operand 1']
    #allocation6 [shape = 's32[2]{0}', space=sflag, size = 0x8, scoped, tag = 'scoped memory for tpu_custom_call.1']
    #allocation7 [shape = 'u8[4096]{0}', space=vmem, size = 0x1000, scoped, tag = 'input window, operand 2, single buffered']
    #allocation8 [shape = 'u8[12288]{0}', space=vmem, size = 0x3000, scoped, tag = 'input window, operand 3, single buffered']
    #allocation9 [shape = 's32[1]{0}', space=sflag, size = 0x4, scoped, tag = 'scoped memory for tpu_custom_call.1']
    #allocation10 [shape = 'u8[16384]{0}', space=vmem, size = 0x4000, scoped, tag = 'input window, operand 4, single buffered']
    #allocation11 [shape = 'u8[8192]{0}', space=vmem, size = 0x2000, scoped, tag = 'output window, operand 0']
    %10 = vsyncpa [#allocation3], 0
    %s11 = scalar_lea.sflag [#allocation3], 1
    %12 = vsyncpa %s11, 0
    %13 = vsyncpa [#allocation6], 0
    %s14 = scalar_lea.sflag [#allocation6], 1
    %15 = vsyncpa %s14, 0
    %16 = vsyncpa [#allocation9], 0
    %17 = vsyncpa [#allocation4], 0
    %s18 = scalar_lea.sflag [#allocation4], 1
    %19 = vsyncpa %s18, 0
    loop: start=0, step=1, limit=4
    $region2: #{tpu_custom_call.1} parent=1 // loop_pre_header
      _
    $region3: #{tpu_custom_call.1} parent=1 // loop_header
      %s21 = sphi 0, %s25
      %p22 = scmp.ge.s32.totalorder %s21, 4
      %s31 = sphi 0, %s33
      %s34 = sphi 0, %s31
      %s35 = sphi 0, %s34
      %s51 = sphi 0, %s35
      %s57 = sphi 0, %s59
      %s60 = sphi 0, %s57
      %s61 = sphi 0, %s60
      %s77 = sphi 0, %s61
      %s81 = sphi 0, %s81
      %s83 = sphi 0, %s81
      %s84 = sphi 0, %s83
      %s98 = sphi 0, %s84
      %s102 = sphi 0, %s102
      %s104 = sphi 0, %s102
      %s105 = sphi 0, %s104
      %s119 = sphi 0, %s105
      %s123 = sphi 0, %s123
      %s125 = sphi 0, %s123
      %s126 = sphi 0, %s125
      %s140 = sphi 0, %s126
      %s146 = sphi 0, %s148
      %s149 = sphi 0, %s146
      %s150 = sphi 0, %s149
      %s166 = sphi 0, %s150
    $region4: #{tpu_custom_call.1} parent=1 // loop_header_branch
      %24 = sbr.rel (%p22) target = $region8
    $region5: #{tpu_custom_call.1} parent=1 // loop_body
      %s26 = ssub.s32 %s21, 1
      %s27 = ssub.s32 %s21, 2
      %s28 = sadd.s32 %s21, 1
      %s29 = ssub.s32 %s21, %s28
      %p30 = scmp.eq.s32.totalorder %s29, 0
      %s32 = sadd.s32 %s31, 1
      %s33 = scalar_select %p30, %s31, %s32
      %p36 = pneg %p30
      %p37 = scmp.eq.s32.totalorder %s21, 1
      %p38 = por %p36, %p37
      %p39 = scmp.ne.s32.totalorder %s31, %s34
      %p40 = scmp.eq.s32.totalorder %s21, 0
      %p41 = por %p39, %p40
      %p42 = scmp.ne.s32.totalorder %s31, %s34
      %p43 = scmp.eq.s32.totalorder %s26, 1
      %p44 = por %p42, %p43
      %p45 = scmp.ne.s32.totalorder %s34, %s35
      %p46 = scmp.eq.s32.totalorder %s26, 0
      %p47 = por %p45, %p46
      %p48 = scmp.ne.s32.totalorder %s34, %s35
      %p49 = scmp.eq.s32.totalorder %s27, 1
      %p50 = por %p48, %p49
      %p52 = scmp.ne.s32.totalorder %s35, %s51
      %p53 = scmp.eq.s32.totalorder %s27, 0
      %p54 = por %p52, %p53
      %s55 = ssub.s32 %s21, %s28
      %p56 = scmp.eq.s32.totalorder %s55, 0
      %s58 = sadd.s32 %s57, 1
      %s59 = scalar_select %p56, %s57, %s58
      %p62 = pneg %p56
      %p63 = scmp.eq.s32.totalorder %s21, 1
      %p64 = por %p62, %p63
      %p65 = scmp.ne.s32.totalorder %s57, %s60
      %p66 = scmp.eq.s32.totalorder %s21, 0
      %p67 = por %p65, %p66
      %p68 = scmp.ne.s32.totalorder %s57, %s60
      %p69 = scmp.eq.s32.totalorder %s26, 1
      %p70 = por %p68, %p69
      %p71 = scmp.ne.s32.totalorder %s60, %s61
      %p72 = scmp.eq.s32.totalorder %s26, 0
      %p73 = por %p71, %p72
      %p74 = scmp.ne.s32.totalorder %s60, %s61
      %p75 = scmp.eq.s32.totalorder %s27, 1
      %p76 = por %p74, %p75
      %p78 = scmp.ne.s32.totalorder %s61, %s77
      %p79 = scmp.eq.s32.totalorder %s27, 0
      %p80 = por %p78, %p79
      %s82 = sadd.s32 %s81, 1
      %p85 = scmp.eq.s32.totalorder %s21, 1
      %p86 = scmp.ne.s32.totalorder %s81, %s83
      %p87 = scmp.eq.s32.totalorder %s21, 0
      %p88 = por %p86, %p87
      %p89 = scmp.ne.s32.totalorder %s81, %s83
      %p90 = scmp.eq.s32.totalorder %s26, 1
      %p91 = por %p89, %p90
      %p92 = scmp.ne.s32.totalorder %s83, %s84
      %p93 = scmp.eq.s32.totalorder %s26, 0
      %p94 = por %p92, %p93
      %p95 = scmp.ne.s32.totalorder %s83, %s84
      %p96 = scmp.eq.s32.totalorder %s27, 1
      %p97 = por %p95, %p96
      %p99 = scmp.ne.s32.totalorder %s84, %s98
      %p100 = scmp.eq.s32.totalorder %s27, 0
      %p101 = por %p99, %p100
      %s103 = sadd.s32 %s102, 1
      %p106 = scmp.eq.s32.totalorder %s21, 1
      %p107 = scmp.ne.s32.totalorder %s102, %s104
      %p108 = scmp.eq.s32.totalorder %s21, 0
      %p109 = por %p107, %p108
      %p110 = scmp.ne.s32.totalorder %s102, %s104
      %p111 = scmp.eq.s32.totalorder %s26, 1
      %p112 = por %p110, %p111
      %p113 = scmp.ne.s32.totalorder %s104, %s105
      %p114 = scmp.eq.s32.totalorder %s26, 0
      %p115 = por %p113, %p114
      %p116 = scmp.ne.s32.totalorder %s104, %s105
      %p117 = scmp.eq.s32.totalorder %s27, 1
      %p118 = por %p116, %p117
      %p120 = scmp.ne.s32.totalorder %s105, %s119
      %p121 = scmp.eq.s32.totalorder %s27, 0
      %p122 = por %p120, %p121
      %s124 = sadd.s32 %s123, 1
      %p127 = scmp.eq.s32.totalorder %s21, 1
      %p128 = scmp.ne.s32.totalorder %s123, %s125
      %p129 = scmp.eq.s32.totalorder %s21, 0
      %p130 = por %p128, %p129
      %p131 = scmp.ne.s32.totalorder %s123, %s125
      %p132 = scmp.eq.s32.totalorder %s26, 1
      %p133 = por %p131, %p132
      %p134 = scmp.ne.s32.totalorder %s125, %s126
      %p135 = scmp.eq.s32.totalorder %s26, 0
      %p136 = por %p134, %p135
      %p137 = scmp.ne.s32.totalorder %s125, %s126
      %p138 = scmp.eq.s32.totalorder %s27, 1
      %p139 = por %p137, %p138
      %p141 = scmp.ne.s32.totalorder %s126, %s140
      %p142 = scmp.eq.s32.totalorder %s27, 0
      %p143 = por %p141, %p142
      %s144 = ssub.s32 %s21, %s28
      %p145 = scmp.eq.s32.totalorder %s144, 0
      %s147 = sadd.s32 %s146, 1
      %s148 = scalar_select %p145, %s146, %s147
      %p151 = pneg %p145
      %p152 = scmp.eq.s32.totalorder %s21, 1
      %p153 = por %p151, %p152
      %p154 = scmp.ne.s32.totalorder %s146, %s149
      %p155 = scmp.eq.s32.totalorder %s21, 0
      %p156 = por %p154, %p155
      %p157 = scmp.ne.s32.totalorder %s146, %s149
      %p158 = scmp.eq.s32.totalorder %s26, 1
      %p159 = por %p157, %p158
      %p160 = scmp.ne.s32.totalorder %s149, %s150
      %p161 = scmp.eq.s32.totalorder %s26, 0
      %p162 = por %p160, %p161
      %p163 = scmp.ne.s32.totalorder %s149, %s150
      %p164 = scmp.eq.s32.totalorder %s27, 1
      %p165 = por %p163, %p164
      %p167 = scmp.ne.s32.totalorder %s150, %s166
      %p168 = scmp.eq.s32.totalorder %s27, 0
      %p169 = por %p167, %p168
      %p170 = scmp.le.s32.totalorder 1, %s21
      %p171 = scmp.lt.s32.totalorder %s21, 3
      %p172 = pnand %p170, %p171
      %p173 = pneg %p172
      // Predicated region
      $region9: #{tpu_custom_call.1} parent=5 // pred_check
        _
      $region10: #{tpu_custom_call.1} parent=5 // pred_check_branch
        %175 = sbr.rel (%p172) target = $region12
      $region11: #{tpu_custom_call.1} parent=5 // pred_region
        %s176 = ssub.s32 %s21, 1
        // Predicated region
        $region13: #{tpu_custom_call.1} parent=11 // pred_check
          %p177 = pneg %p94
        $region14: #{tpu_custom_call.1} parent=11 // pred_check_branch
          %179 = sbr.rel (%p177) target = $region16
        $region15: #{tpu_custom_call.1} parent=11 // pred_region
          %s181 = ssub.s32 128, 128
          %182 = vsyncadd [#allocation6], %s181
          %s184 = sshll.u32 [#allocation7], 4
          %s185 = int_to_ptr.vmem [resolvable:$true] %s184
          %187 = dma.hbm_to_vmem [thread:$0]  %s2, 128, %s185, [#allocation6]
        $region16: #{tpu_custom_call.1} parent=11 // pred_fallthru
          _
        // Predicated region
        $region17: #{tpu_custom_call.1} parent=11 // pred_check
          %p188 = pneg %p115
        $region18: #{tpu_custom_call.1} parent=11 // pred_check_branch
          %190 = sbr.rel (%p188) target = $region20
        $region19: #{tpu_custom_call.1} parent=11 // pred_region
          %s192 = ssub.s32 384, 384
          %193 = vsyncadd [#allocation9], %s192
          %s195 = sshll.u32 [#allocation8], 4
          %s196 = int_to_ptr.vmem [resolvable:$true] %s195
          %198 = dma.hbm_to_vmem [thread:$0]  %s3, 384, %s196, [#allocation9]
        $region20: #{tpu_custom_call.1} parent=11 // pred_fallthru
          _
        // Predicated region
        $region21: #{tpu_custom_call.1} parent=11 // pred_check
          %p199 = pneg %p136
        $region22: #{tpu_custom_call.1} parent=11 // pred_check_branch
          %201 = sbr.rel (%p199) target = $region24
        $region23: #{tpu_custom_call.1} parent=11 // pred_region
          %s203 = ssub.s32 512, 512
          %204 = vsyncadd [#allocation9], %s203
          %s205 = sshll.u32 [#allocation10], 4
          %s206 = int_to_ptr.vmem [resolvable:$true] %s205
          %211 = dma.hbm_to_vmem [thread:$0]  %s4, 512, %s206, [#allocation9], 256, 256, 16
        $region24: #{tpu_custom_call.1} parent=11 // pred_fallthru
          _
      $region12: #{tpu_custom_call.1} parent=5 // pred_fallthru
        _
      %p212 = scmp.lt.s32.totalorder %s21, 2
      // Predicated region
      $region25: #{tpu_custom_call.1} parent=5 // pred_check
        %p213 = pneg %p212
      $region26: #{tpu_custom_call.1} parent=5 // pred_check_branch
        %215 = sbr.rel (%p213) target = $region28
      $region27: #{tpu_custom_call.1} parent=5 // pred_region
        // Predicated region
        $region29: #{tpu_custom_call.1} parent=27 // pred_check
          %p216 = pneg %p41
        $region30: #{tpu_custom_call.1} parent=27 // pred_check_branch
          %218 = sbr.rel (%p216) target = $region32
        $region31: #{tpu_custom_call.1} parent=27 // pred_region
          %s219 = sand.u32 %s31, 1
          %s220 = scalar_lea.sflag [#allocation3], %s219
          %s221 = sand.u32 %s31, 1
          %s222 = smul.addr %s221, 8
          %s223 = scalar_lea.vmem [#allocation2], %s222
          %s224 = smul.u32 2, %s21
          %s226 = ssub.s32 128, 128
          %227 = vsyncadd %s220, %s226
          %s228 = smul.addr %s224, 64
          %s229 = scalar_lea.hbm %s0, %s228
          %s231 = sshll.u32 %s223, 4
          %s232 = int_to_ptr.vmem [resolvable:$true] %s231
          %234 = dma.hbm_to_vmem [thread:$0]  %s229, 128, %s232, %s220
        $region32: #{tpu_custom_call.1} parent=27 // pred_fallthru
          _
        // Predicated region
        $region33: #{tpu_custom_call.1} parent=27 // pred_check
          %p235 = pneg %p67
        $region34: #{tpu_custom_call.1} parent=27 // pred_check_branch
          %237 = sbr.rel (%p235) target = $region36
        $region35: #{tpu_custom_call.1} parent=27 // pred_region
          %s238 = sand.u32 %s21, 1
          %s239 = scalar_lea.sflag [#allocation6], %s238
          %s240 = sand.u32 %s57, 1
          %s241 = smul.addr %s240, 8
          %s242 = scalar_lea.vmem [#allocation5], %s241
          %s243 = smul.u32 2, %s21
          %s245 = ssub.s32 128, 128
          %246 = vsyncadd %s239, %s245
          %s247 = smul.addr %s243, 64
          %s248 = scalar_lea.hbm %s1, %s247
          %s250 = sshll.u32 %s242, 4
          %s251 = int_to_ptr.vmem [resolvable:$true] %s250
          %253 = dma.hbm_to_vmem [thread:$0]  %s248, 128, %s251, %s239
        $region36: #{tpu_custom_call.1} parent=27 // pred_fallthru
          _
      $region28: #{tpu_custom_call.1} parent=5 // pred_fallthru
        _
      %p254 = scmp.le.s32.totalorder 1, %s21
      %p255 = scmp.lt.s32.totalorder %s21, 3
      %p256 = pnand %p254, %p255
      %p257 = pneg %p256
      // Predicated region
      $region37: #{tpu_custom_call.1} parent=5 // pred_check
        _
      $region38: #{tpu_custom_call.1} parent=5 // pred_check_branch
        %259 = sbr.rel (%p256) target = $region40
      $region39: #{tpu_custom_call.1} parent=5 // pred_region
        %s260 = ssub.s32 %s21, 1
        %s261 = sand.u32 %s34, 1
        %s262 = scalar_lea.sflag [#allocation3], %s261
        %s263 = sand.u32 %s34, 1
        %s264 = smul.addr %s263, 8
        %s265 = scalar_lea.vmem [#allocation2], %s264
        // Predicated region
        $region41: #{tpu_custom_call.1} parent=39 // pred_check
          %p266 = pneg %p47
        $region42: #{tpu_custom_call.1} parent=39 // pred_check_branch
          %268 = sbr.rel (%p266) target = $region44
        $region43: #{tpu_custom_call.1} parent=39 // pred_region
          %269 = dma.done %s262, 128
        $region44: #{tpu_custom_call.1} parent=39 // pred_fallthru
          _
        %s270 = sand.u32 %s26, 1
        %s271 = scalar_lea.sflag [#allocation6], %s270
        %s272 = sand.u32 %s60, 1
        %s273 = smul.addr %s272, 8
        %s274 = scalar_lea.vmem [#allocation5], %s273
        // Predicated region
        $region45: #{tpu_custom_call.1} parent=39 // pred_check
          %p275 = pneg %p73
        $region46: #{tpu_custom_call.1} parent=39 // pred_check_branch
          %277 = sbr.rel (%p275) target = $region48
        $region47: #{tpu_custom_call.1} parent=39 // pred_region
          %278 = dma.done %s271, 128
        $region48: #{tpu_custom_call.1} parent=39 // pred_fallthru
          _
        // Predicated region
        $region49: #{tpu_custom_call.1} parent=39 // pred_check
          %p279 = pneg %p94
        $region50: #{tpu_custom_call.1} parent=39 // pred_check_branch
          %281 = sbr.rel (%p279) target = $region52
        $region51: #{tpu_custom_call.1} parent=39 // pred_region
          %282 = dma.done [#allocation6], 128
        $region52: #{tpu_custom_call.1} parent=39 // pred_fallthru
          _
        // Predicated region
        $region53: #{tpu_custom_call.1} parent=39 // pred_check
          %p283 = pneg %p115
        $region54: #{tpu_custom_call.1} parent=39 // pred_check_branch
          %285 = sbr.rel (%p283) target = $region56
        $region55: #{tpu_custom_call.1} parent=39 // pred_region
          %286 = dma.done [#allocation9], 384
        $region56: #{tpu_custom_call.1} parent=39 // pred_fallthru
          _
        // Predicated region
        $region57: #{tpu_custom_call.1} parent=39 // pred_check
          %p287 = pneg %p136
        $region58: #{tpu_custom_call.1} parent=39 // pred_check_branch
          %289 = sbr.rel (%p287) target = $region60
        $region59: #{tpu_custom_call.1} parent=39 // pred_region
          %290 = dma.done [#allocation9], 512
        $region60: #{tpu_custom_call.1} parent=39 // pred_fallthru
          _
        %s291 = sand.u32 %s34, 1
        %s292 = scalar_lea.sflag [#allocation3], %s291
        %s293 = sand.u32 %s34, 1
        %s294 = smul.addr %s293, 8
        %s295 = scalar_lea.vmem [#allocation2], %s294
        %p296 = pneg %p47
        %p297 = pneg %p44
        %s298 = sand.u32 %s26, 1
        %s299 = scalar_lea.sflag [#allocation6], %s298
        %s300 = sand.u32 %s60, 1
        %s301 = smul.addr %s300, 8
        %s302 = scalar_lea.vmem [#allocation5], %s301
        %p303 = pneg %p73
        %p304 = pneg %p70
        %p305 = pneg %p94
        %p306 = pneg %p91
        %p307 = pneg %p115
        %p308 = pneg %p112
        %p309 = pneg %p136
        %p310 = pneg %p133
        %p311 = pneg %p162
        %p312 = pneg %p159
        %s313 = sand.u32 %s149, 1
        %s314 = scalar_lea.sflag [#allocation4], %s313
        %s315 = sand.u32 %s149, 1
        %s316 = smul.addr %s315, 8
        %s317 = scalar_lea.vmem [#allocation11], %s316
        %s318 = smul.u32 2, %s26
        %s319 = smul.u32 2, %s26
        %s320 = smul.u32 2, %s26
        %v321 = vld [vmem:[%s265] sm:$0xff]
        %v322 = vld [vmem:[%s274] sm:$0xff]
        %v323 = vld [vmem:[#allocation10] sm:$0xff]
        %v324 = vld [vmem:[#allocation10 + $0x8] sm:$0xff]
        %v325 = vld [vmem:[#allocation10 + $0x10] sm:$0x1]
        %v326 = vld [vmem:[#allocation10 + $0x18] sm:$0x1]
        %v327 = vld [vmem:[#allocation7] sm:$0xff]
        %329 = vrot.lane.b32.xlu0 %v327, 124
        %v330 = vpop.permute.xlu0 %329
        %v332 = vcombine.high %v322, %v322
        %vm333 = vcmask 31744
        %v334 = vsel %vm333, %v330, 0
        %vm336 = vcmask 1043456
        %v337 = vsel %vm336, %v322, 0
        %v339 = vsel %vm336, %v332, 0
        %341 = vmatprep.subr.mxu0 %v339
        %342 = vmatpush1.msra.mxu0 %v337
        %343 = vmatprep.subr.mxu0 0.0
        %344 = vmatpush1.msra.mxu0 0.0
        %345 = vmatprep.subr.mxu0 0.0
        %346 = vmatpush1.msra.mxu0 0.0
        %347 = vmatprep.subr.mxu0 0.0
        %348 = vmatpush1.msra.mxu0 0.0
        %349 = vmatprep.subr.mxu0 0.0
        %350 = vmatpush1.msra.mxu0 0.0
        %351 = vmatprep.subr.mxu0 0.0
        %352 = vmatpush1.msra.mxu0 0.0
        %353 = vmatprep.subr.mxu0 0.0
        %354 = vmatpush1.msra.mxu0 0.0
        %355 = vmatprep.subr.mxu0 0.0
        %356 = vmatpush1.msra.mxu0 0.0
        %357 = vmatprep.subr.mxu0 0.0
        %358 = vmatpush1.msra.mxu0 0.0
        %359 = vmatprep.subr.mxu0 0.0
        %360 = vmatpush1.msra.mxu0 0.0
        %361 = vmatprep.subr.mxu0 0.0
        %362 = vmatpush1.msra.mxu0 0.0
        %363 = vmatprep.subr.mxu0 0.0
        %364 = vmatpush1.msra.mxu0 0.0
        %365 = vmatprep.subr.mxu0 0.0
        %366 = vmatpush1.msra.mxu0 0.0
        %367 = vmatprep.subr.mxu0 0.0
        %368 = vmatpush1.msra.mxu0 0.0
        %369 = vmatprep.subr.mxu0 0.0
        %370 = vmatpush1.msra.mxu0 0.0
        %371 = vmatprep.subr.mxu0 0.0
        %372 = vmatpush1.msra.mxu0 0.0
        %373 = vmatprep.subr.mxu0 0.0
        %374 = vmatpush1.msra.mxu0 0.0
        %375 = vmatprep.subr.mxu0 0.0
        %376 = vmatpush1.msra.mxu0 0.0
        %377 = vmatprep.subr.mxu0 0.0
        %378 = vmatpush1.msra.mxu0 0.0
        %379 = vmatprep.subr.mxu0 0.0
        %380 = vmatpush1.msra.mxu0 0.0
        %381 = vmatprep.subr.mxu0 0.0
        %382 = vmatpush1.msra.mxu0 0.0
        %383 = vmatprep.subr.mxu0 0.0
        %384 = vmatpush1.msra.mxu0 0.0
        %385 = vmatprep.subr.mxu0 0.0
        %386 = vmatpush1.msra.mxu0 0.0
        %387 = vmatprep.subr.mxu0 0.0
        %388 = vmatpush1.msra.mxu0 0.0
        %389 = vmatprep.subr.mxu0 0.0
        %390 = vmatpush1.msra.mxu0 0.0
        %391 = vmatprep.subr.mxu0 0.0
        %392 = vmatpush1.msra.mxu0 0.0
        %393 = vmatprep.subr.mxu0 0.0
        %394 = vmatpush1.msra.mxu0 0.0
        %395 = vmatprep.subr.mxu0 0.0
        %396 = vmatpush1.msra.mxu0 0.0
        %397 = vmatprep.subr.mxu0 0.0
        %398 = vmatpush1.msra.mxu0 0.0
        %399 = vmatprep.subr.mxu0 0.0
        %400 = vmatpush1.msra.mxu0 0.0
        %401 = vmatprep.subr.mxu0 0.0
        %402 = vmatpush1.msra.mxu0 0.0
        %403 = vmatprep.subr.mxu0 0.0
        %404 = vmatpush1.msra.mxu0 0.0
        %405 = vmatprep.mubr.f32.mxu0 0.0
        %406 = vmatmul.mubr.f32.gmra.mrb[0].mxu0 %v334
        %v407 = vpop.f32.mrb[0].mxu0
        %v408 = vadd.f32 0.0, %v407
        %v409 = vpop.f32.mrb[0].mxu0
        %v410 = vadd.f32 0.0, %v409
        %411 = vdwg.mxu0
        %v413 = vcombine.high %v321, %v321
        %v414 = vsel %vm333, %v327, 0
        %v416 = vsel %vm336, %v321, 0
        %v418 = vsel %vm336, %v413, 0
        %420 = vmatprep.subr.mxu0 %v418
        %421 = vmatpush1.msra.mxu0 %v416
        %422 = vmatprep.subr.mxu0 0.0
        %423 = vmatpush1.msra.mxu0 0.0
        %424 = vmatprep.subr.mxu0 0.0
        %425 = vmatpush1.msra.mxu0 0.0
        %426 = vmatprep.subr.mxu0 0.0
        %427 = vmatpush1.msra.mxu0 0.0
        %428 = vmatprep.subr.mxu0 0.0
        %429 = vmatpush1.msra.mxu0 0.0
        %430 = vmatprep.subr.mxu0 0.0
        %431 = vmatpush1.msra.mxu0 0.0
        %432 = vmatprep.subr.mxu0 0.0
        %433 = vmatpush1.msra.mxu0 0.0
        %434 = vmatprep.subr.mxu0 0.0
        %435 = vmatpush1.msra.mxu0 0.0
        %436 = vmatprep.subr.mxu0 0.0
        %437 = vmatpush1.msra.mxu0 0.0
        %438 = vmatprep.subr.mxu0 0.0
        %439 = vmatpush1.msra.mxu0 0.0
        %440 = vmatprep.subr.mxu0 0.0
        %441 = vmatpush1.msra.mxu0 0.0
        %442 = vmatprep.subr.mxu0 0.0
        %443 = vmatpush1.msra.mxu0 0.0
        %444 = vmatprep.subr.mxu0 0.0
        %445 = vmatpush1.msra.mxu0 0.0
        %446 = vmatprep.subr.mxu0 0.0
        %447 = vmatpush1.msra.mxu0 0.0
        %448 = vmatprep.subr.mxu0 0.0
        %449 = vmatpush1.msra.mxu0 0.0
        %450 = vmatprep.subr.mxu0 0.0
        %451 = vmatpush1.msra.mxu0 0.0
        %452 = vmatprep.subr.mxu0 0.0
        %453 = vmatpush1.msra.mxu0 0.0
        %454 = vmatprep.subr.mxu0 0.0
        %455 = vmatpush1.msra.mxu0 0.0
        %456 = vmatprep.subr.mxu0 0.0
        %457 = vmatpush1.msra.mxu0 0.0
        %458 = vmatprep.subr.mxu0 0.0
        %459 = vmatpush1.msra.mxu0 0.0
        %460 = vmatprep.subr.mxu0 0.0
        %461 = vmatpush1.msra.mxu0 0.0
        %462 = vmatprep.subr.mxu0 0.0
        %463 = vmatpush1.msra.mxu0 0.0
        %464 = vmatprep.subr.mxu0 0.0
        %465 = vmatpush1.msra.mxu0 0.0
        %466 = vmatprep.subr.mxu0 0.0
        %467 = vmatpush1.msra.mxu0 0.0
        %468 = vmatprep.subr.mxu0 0.0
        %469 = vmatpush1.msra.mxu0 0.0
        %470 = vmatprep.subr.mxu0 0.0
        %471 = vmatpush1.msra.mxu0 0.0
        %472 = vmatprep.subr.mxu0 0.0
        %473 = vmatpush1.msra.mxu0 0.0
        %474 = vmatprep.subr.mxu0 0.0
        %475 = vmatpush1.msra.mxu0 0.0
        %476 = vmatprep.subr.mxu0 0.0
        %477 = vmatpush1.msra.mxu0 0.0
        %478 = vmatprep.subr.mxu0 0.0
        %479 = vmatpush1.msra.mxu0 0.0
        %480 = vmatprep.subr.mxu0 0.0
        %481 = vmatpush1.msra.mxu0 0.0
        %482 = vmatprep.subr.mxu0 0.0
        %483 = vmatpush1.msra.mxu0 0.0
        %484 = vmatprep.mubr.f32.mxu0 0.0
        %485 = vmatmul.mubr.f32.gmra.mrb[0].mxu0 %v414
        %v486 = vpop.f32.mrb[0].mxu0
        %v487 = vadd.f32 %v408, %v486
        %v488 = vpop.f32.mrb[0].mxu0
        %v489 = vadd.f32 %v410, %v488
        %490 = vdwg.mxu0
        %491 = vset.pattern.permute.xlu0 8
        %492 = vperm.xlu0 %491, %v327
        %v493 = vpop.permute.xlu0 %492
        %v495 = vadd.f32 %v487, %v493
        %v496 = vadd.f32 %v489, %v493
        %v497 = vmax.f32 %v495, 0.0
        %v498 = vmax.f32 %v496, 0.0
        %v499 = vld [vmem:[#allocation8] sm:$0xff]
        %v500 = vld [vmem:[#allocation8 + $0x8] sm:$0xff]
        %v501 = vld [vmem:[#allocation8 + $0x10] sm:$0xff]
        %503 = vrot.lane.b32.xlu0 %v498, 17
        %v504 = vpop.permute.xlu0 %503
        %507 = vrot.lane.b32.xlu0 %v497, 17
        %v508 = vpop.permute.xlu0 %507
        %vm509 = vcmask 138240
        %v510 = vsel %vm509, %v508, %v504
        %v513 = vsel %vm509, %v504, %v508
        %v514 = vlaneseq
        %v515 = vshrl.u32 %v514, 7
        %v516 = vsub.s32 0, %v515
        %v517 = vrot.slane %v323, %v516
        %v518 = vlaneseq
        %v519 = vshrl.u32 %v518, 7
        %v520 = vsub.s32 0, %v519
        %v521 = vrot.slane %v324, %v520
        %v522 = vmul.f32 %v513, %v517
        %v523 = vmul.f32 %v510, %v521
        %524 = vrot.lane.b32.xlu0 %v498, 16
        %v525 = vpop.permute.xlu0 %524
        %527 = vrot.lane.b32.xlu0 %v497, 16
        %v528 = vpop.permute.xlu0 %527
        %vm529 = vcmask 130048
        %v530 = vsel %vm529, %v528, %v525
        %v533 = vsel %vm529, %v525, %v528
        %v534 = vlaneseq
        %v535 = vshrl.u32 %v534, 7
        %v536 = vsub.s32 1, %v535
        %v537 = vrot.slane %v323, %v536
        %v538 = vlaneseq
        %v539 = vshrl.u32 %v538, 7
        %v540 = vsub.s32 1, %v539
        %v541 = vrot.slane %v324, %v540
        %v542 = vmul.f32 %v533, %v537
        %v543 = vmul.f32 %v530, %v541
        %544 = vrot.lane.b32.xlu0 %v498, 15
        %v545 = vpop.permute.xlu0 %544
        %547 = vrot.lane.b32.xlu0 %v497, 15
        %v548 = vpop.permute.xlu0 %547
        %vm549 = vcmask 121856
        %v550 = vsel %vm549, %v548, %v545
        %v553 = vsel %vm549, %v545, %v548
        %v554 = vlaneseq
        %v555 = vshrl.u32 %v554, 7
        %v556 = vsub.s32 2, %v555
        %v557 = vrot.slane %v323, %v556
        %v558 = vlaneseq
        %v559 = vshrl.u32 %v558, 7
        %v560 = vsub.s32 2, %v559
        %v561 = vrot.slane %v324, %v560
        %v562 = vmul.f32 %v553, %v557
        %v563 = vmul.f32 %v550, %v561
        %564 = vrot.lane.b32.xlu0 %v498, 1
        %v565 = vpop.permute.xlu0 %564
        %567 = vrot.lane.b32.xlu0 %v497, 1
        %v568 = vpop.permute.xlu0 %567
        %vm569 = vcmask 7168
        %v570 = vsel %vm569, %v568, %v565
        %v573 = vsel %vm569, %v565, %v568
        %v574 = vlaneseq
        %v575 = vshrl.u32 %v574, 7
        %v576 = vsub.s32 3, %v575
        %v577 = vrot.slane %v323, %v576
        %v578 = vlaneseq
        %v579 = vshrl.u32 %v578, 7
        %v580 = vsub.s32 3, %v579
        %v581 = vrot.slane %v324, %v580
        %v582 = vmul.f32 %v573, %v577
        %v583 = vmul.f32 %v570, %v581
        %584 = vrot.lane.b32.xlu0 %v497, 127
        %v585 = vpop.permute.xlu0 %584
        %586 = vrot.lane.b32.xlu0 %v498, 127
        %v587 = vpop.permute.xlu0 %586
        %vm588 = vcmask 1039360
        %v589 = vsel %vm588, %v585, %v587
        %v593 = vsel %vm588, %v587, %v585
        %v594 = vlaneseq
        %v595 = vshrl.u32 %v594, 7
        %v596 = vsub.s32 5, %v595
        %v597 = vrot.slane %v323, %v596
        %v598 = vlaneseq
        %v599 = vshrl.u32 %v598, 7
        %v600 = vsub.s32 5, %v599
        %v601 = vrot.slane %v324, %v600
        %v602 = vmul.f32 %v589, %v597
        %v603 = vmul.f32 %v593, %v601
        %604 = vrot.lane.b32.xlu0 %v497, 113
        %v605 = vpop.permute.xlu0 %604
        %606 = vrot.lane.b32.xlu0 %v498, 113
        %v607 = vpop.permute.xlu0 %606
        %vm608 = vcmask 924672
        %v609 = vsel %vm608, %v605, %v607
        %v613 = vsel %vm608, %v607, %v605
        %v614 = vlaneseq
        %v615 = vshrl.u32 %v614, 7
        %v616 = vsub.s32 6, %v615
        %v617 = vrot.slane %v323, %v616
        %v618 = vlaneseq
        %v619 = vshrl.u32 %v618, 7
        %v620 = vsub.s32 6, %v619
        %v621 = vrot.slane %v324, %v620
        %v622 = vmul.f32 %v609, %v617
        %v623 = vmul.f32 %v613, %v621
        %624 = vrot.lane.b32.xlu0 %v497, 112
        %v625 = vpop.permute.xlu0 %624
        %626 = vrot.lane.b32.xlu0 %v498, 112
        %v627 = vpop.permute.xlu0 %626
        %vm628 = vcmask 916480
        %v629 = vsel %vm628, %v625, %v627
        %v633 = vsel %vm628, %v627, %v625
        %v634 = vlaneseq
        %v635 = vshrl.u32 %v634, 7
        %v636 = vsub.s32 7, %v635
        %v637 = vrot.slane %v323, %v636
        %v638 = vlaneseq
        %v639 = vshrl.u32 %v638, 7
        %v640 = vsub.s32 7, %v639
        %v641 = vrot.slane %v324, %v640
        %v642 = vmul.f32 %v629, %v637
        %v643 = vmul.f32 %v633, %v641
        %644 = vrot.lane.b32.xlu0 %v497, 111
        %v645 = vpop.permute.xlu0 %644
        %646 = vrot.lane.b32.xlu0 %v498, 111
        %v647 = vpop.permute.xlu0 %646
        %vm648 = vcmask 908288
        %v649 = vsel %vm648, %v645, %v647
        %v653 = vsel %vm648, %v647, %v645
        %v654 = vlaneseq
        %v655 = vshrl.u32 %v654, 7
        %v656 = vsub.s32 0, %v655
        %v657 = vrot.slane %v325, %v656
        %v658 = vlaneseq
        %v659 = vshrl.u32 %v658, 7
        %v660 = vsub.s32 0, %v659
        %v661 = vrot.slane %v326, %v660
        %v662 = vmul.f32 %v649, %v657
        %v663 = vmul.f32 %v653, %v661
        %665 = vset.pattern.permute.xlu0 0
        %666 = vperm.xlu0 %665, %v501
        %v667 = vpop.permute.xlu0 %666
        %vm669 = vcmask 588800
        %v671 = vsel %vm669, %v499, 0
        %673 = vmatprep.subr.mxu0 %v523
        %674 = vmatpush1.msra.mxu0 %v522
        %675 = vmatprep.subr.mxu0 %v543
        %676 = vmatpush1.msra.mxu0 %v542
        %677 = vmatprep.subr.mxu0 %v563
        %678 = vmatpush1.msra.mxu0 %v562
        %679 = vmatprep.subr.mxu0 %v583
        %680 = vmatpush1.msra.mxu0 %v582
        %681 = vmatprep.subr.mxu0 %v498
        %682 = vmatpush1.msra.mxu0 %v497
        %683 = vmatprep.subr.mxu0 %v603
        %684 = vmatpush1.msra.mxu0 %v602
        %685 = vmatprep.subr.mxu0 %v623
        %686 = vmatpush1.msra.mxu0 %v622
        %687 = vmatprep.subr.mxu0 %v643
        %688 = vmatpush1.msra.mxu0 %v642
        %689 = vmatprep.subr.mxu0 %v663
        %690 = vmatpush1.msra.mxu0 %v662
        %691 = vmatprep.subr.mxu0 0.0
        %692 = vmatpush1.msra.mxu0 0.0
        %693 = vmatprep.subr.mxu0 0.0
        %694 = vmatpush1.msra.mxu0 0.0
        %695 = vmatprep.subr.mxu0 0.0
        %696 = vmatpush1.msra.mxu0 0.0
        %697 = vmatprep.subr.mxu0 0.0
        %698 = vmatpush1.msra.mxu0 0.0
        %699 = vmatprep.subr.mxu0 0.0
        %700 = vmatpush1.msra.mxu0 0.0
        %701 = vmatprep.subr.mxu0 0.0
        %702 = vmatpush1.msra.mxu0 0.0
        %703 = vmatprep.subr.mxu0 0.0
        %704 = vmatpush1.msra.mxu0 0.0
        %705 = vmatprep.subr.mxu0 0.0
        %706 = vmatpush1.msra.mxu0 0.0
        %707 = vmatprep.subr.mxu0 0.0
        %708 = vmatpush1.msra.mxu0 0.0
        %709 = vmatprep.subr.mxu0 0.0
        %710 = vmatpush1.msra.mxu0 0.0
        %711 = vmatprep.subr.mxu0 0.0
        %712 = vmatpush1.msra.mxu0 0.0
        %713 = vmatprep.subr.mxu0 0.0
        %714 = vmatpush1.msra.mxu0 0.0
        %715 = vmatprep.subr.mxu0 0.0
        %716 = vmatpush1.msra.mxu0 0.0
        %717 = vmatprep.subr.mxu0 0.0
        %718 = vmatpush1.msra.mxu0 0.0
        %719 = vmatprep.subr.mxu0 0.0
        %720 = vmatpush1.msra.mxu0 0.0
        %721 = vmatprep.subr.mxu0 0.0
        %722 = vmatpush1.msra.mxu0 0.0
        %723 = vmatprep.subr.mxu0 0.0
        %724 = vmatpush1.msra.mxu0 0.0
        %725 = vmatprep.subr.mxu0 0.0
        %726 = vmatpush1.msra.mxu0 0.0
        %727 = vmatprep.subr.mxu0 0.0
        %728 = vmatpush1.msra.mxu0 0.0
        %729 = vmatprep.subr.mxu0 0.0
        %730 = vmatpush1.msra.mxu0 0.0
        %731 = vmatprep.subr.mxu0 0.0
        %732 = vmatpush1.msra.mxu0 0.0
        %733 = vmatprep.subr.mxu0 0.0
        %734 = vmatpush1.msra.mxu0 0.0
        %735 = vmatprep.subr.mxu0 0.0
        %736 = vmatpush1.msra.mxu0 0.0
        %737 = vmatprep.mubr.f32.mxu0 0.0
        %738 = vmatmul.mubr.f32.gmra.mrb[0].mxu0 %v671
        %v739 = vpop.f32.mrb[0].mxu0
        %v740 = vadd.f32 %v667, %v739
        %v741 = vpop.f32.mrb[0].mxu0
        %v742 = vadd.f32 %v667, %v741
        %743 = vdwg.mxu0
        %v744 = vmax.f32 %v740, 0.0
        %v745 = vmax.f32 %v742, 0.0
        %747 = vrot.lane.b32.xlu0 %v745, 17
        %v748 = vpop.permute.xlu0 %747
        %751 = vrot.lane.b32.xlu0 %v744, 17
        %v752 = vpop.permute.xlu0 %751
        %v753 = vsel %vm509, %v752, %v748
        %v756 = vsel %vm509, %v748, %v752
        %v757 = vmul.f32 %v756, %v517
        %v758 = vmul.f32 %v753, %v521
        %759 = vrot.lane.b32.xlu0 %v745, 16
        %v760 = vpop.permute.xlu0 %759
        %762 = vrot.lane.b32.xlu0 %v744, 16
        %v763 = vpop.permute.xlu0 %762
        %v764 = vsel %vm529, %v763, %v760
        %v767 = vsel %vm529, %v760, %v763
        %v768 = vmul.f32 %v767, %v537
        %v769 = vmul.f32 %v764, %v541
        %770 = vrot.lane.b32.xlu0 %v745, 15
        %v771 = vpop.permute.xlu0 %770
        %773 = vrot.lane.b32.xlu0 %v744, 15
        %v774 = vpop.permute.xlu0 %773
        %v775 = vsel %vm549, %v774, %v771
        %v778 = vsel %vm549, %v771, %v774
        %v779 = vmul.f32 %v778, %v557
        %v780 = vmul.f32 %v775, %v561
        %781 = vrot.lane.b32.xlu0 %v745, 1
        %v782 = vpop.permute.xlu0 %781
        %784 = vrot.lane.b32.xlu0 %v744, 1
        %v785 = vpop.permute.xlu0 %784
        %v786 = vsel %vm569, %v785, %v782
        %v789 = vsel %vm569, %v782, %v785
        %v790 = vmul.f32 %v789, %v577
        %v791 = vmul.f32 %v786, %v581
        %792 = vrot.lane.b32.xlu0 %v744, 127
        %v793 = vpop.permute.xlu0 %792
        %794 = vrot.lane.b32.xlu0 %v745, 127
        %v795 = vpop.permute.xlu0 %794
        %v796 = vsel %vm588, %v793, %v795
        %v800 = vsel %vm588, %v795, %v793
        %v801 = vmul.f32 %v796, %v597
        %v802 = vmul.f32 %v800, %v601
        %803 = vrot.lane.b32.xlu0 %v744, 113
        %v804 = vpop.permute.xlu0 %803
        %805 = vrot.lane.b32.xlu0 %v745, 113
        %v806 = vpop.permute.xlu0 %805
        %v807 = vsel %vm608, %v804, %v806
        %v811 = vsel %vm608, %v806, %v804
        %v812 = vmul.f32 %v807, %v617
        %v813 = vmul.f32 %v811, %v621
        %814 = vrot.lane.b32.xlu0 %v744, 112
        %v815 = vpop.permute.xlu0 %814
        %816 = vrot.lane.b32.xlu0 %v745, 112
        %v817 = vpop.permute.xlu0 %816
        %v818 = vsel %vm628, %v815, %v817
        %v822 = vsel %vm628, %v817, %v815
        %v823 = vmul.f32 %v818, %v637
        %v824 = vmul.f32 %v822, %v641
        %825 = vrot.lane.b32.xlu0 %v744, 111
        %v826 = vpop.permute.xlu0 %825
        %827 = vrot.lane.b32.xlu0 %v745, 111
        %v828 = vpop.permute.xlu0 %827
        %v829 = vsel %vm648, %v826, %v828
        %v833 = vsel %vm648, %v828, %v826
        %v834 = vmul.f32 %v829, %v657
        %v835 = vmul.f32 %v833, %v661
        %836 = vset.pattern.permute.xlu0 1
        %837 = vperm.xlu0 %836, %v501
        %v838 = vpop.permute.xlu0 %837
        %v841 = vsel %vm669, %v500, 0
        %843 = vmatprep.subr.mxu0 %v758
        %844 = vmatpush1.msra.mxu0 %v757
        %845 = vmatprep.subr.mxu0 %v769
        %846 = vmatpush1.msra.mxu0 %v768
        %847 = vmatprep.subr.mxu0 %v780
        %848 = vmatpush1.msra.mxu0 %v779
        %849 = vmatprep.subr.mxu0 %v791
        %850 = vmatpush1.msra.mxu0 %v790
        %851 = vmatprep.subr.mxu0 %v745
        %852 = vmatpush1.msra.mxu0 %v744
        %853 = vmatprep.subr.mxu0 %v802
        %854 = vmatpush1.msra.mxu0 %v801
        %855 = vmatprep.subr.mxu0 %v813
        %856 = vmatpush1.msra.mxu0 %v812
        %857 = vmatprep.subr.mxu0 %v824
        %858 = vmatpush1.msra.mxu0 %v823
        %859 = vmatprep.subr.mxu0 %v835
        %860 = vmatpush1.msra.mxu0 %v834
        %861 = vmatprep.subr.mxu0 0.0
        %862 = vmatpush1.msra.mxu0 0.0
        %863 = vmatprep.subr.mxu0 0.0
        %864 = vmatpush1.msra.mxu0 0.0
        %865 = vmatprep.subr.mxu0 0.0
        %866 = vmatpush1.msra.mxu0 0.0
        %867 = vmatprep.subr.mxu0 0.0
        %868 = vmatpush1.msra.mxu0 0.0
        %869 = vmatprep.subr.mxu0 0.0
        %870 = vmatpush1.msra.mxu0 0.0
        %871 = vmatprep.subr.mxu0 0.0
        %872 = vmatpush1.msra.mxu0 0.0
        %873 = vmatprep.subr.mxu0 0.0
        %874 = vmatpush1.msra.mxu0 0.0
        %875 = vmatprep.subr.mxu0 0.0
        %876 = vmatpush1.msra.mxu0 0.0
        %877 = vmatprep.subr.mxu0 0.0
        %878 = vmatpush1.msra.mxu0 0.0
        %879 = vmatprep.subr.mxu0 0.0
        %880 = vmatpush1.msra.mxu0 0.0
        %881 = vmatprep.subr.mxu0 0.0
        %882 = vmatpush1.msra.mxu0 0.0
        %883 = vmatprep.subr.mxu0 0.0
        %884 = vmatpush1.msra.mxu0 0.0
        %885 = vmatprep.subr.mxu0 0.0
        %886 = vmatpush1.msra.mxu0 0.0
        %887 = vmatprep.subr.mxu0 0.0
        %888 = vmatpush1.msra.mxu0 0.0
        %889 = vmatprep.subr.mxu0 0.0
        %890 = vmatpush1.msra.mxu0 0.0
        %891 = vmatprep.subr.mxu0 0.0
        %892 = vmatpush1.msra.mxu0 0.0
        %893 = vmatprep.subr.mxu0 0.0
        %894 = vmatpush1.msra.mxu0 0.0
        %895 = vmatprep.subr.mxu0 0.0
        %896 = vmatpush1.msra.mxu0 0.0
        %897 = vmatprep.subr.mxu0 0.0
        %898 = vmatpush1.msra.mxu0 0.0
        %899 = vmatprep.subr.mxu0 0.0
        %900 = vmatpush1.msra.mxu0 0.0
        %901 = vmatprep.subr.mxu0 0.0
        %902 = vmatpush1.msra.mxu0 0.0
        %903 = vmatprep.subr.mxu0 0.0
        %904 = vmatpush1.msra.mxu0 0.0
        %905 = vmatprep.subr.mxu0 0.0
        %906 = vmatpush1.msra.mxu0 0.0
        %907 = vmatprep.mubr.f32.mxu0 0.0
        %908 = vmatmul.mubr.f32.gmra.mrb[0].mxu0 %v841
        %v909 = vpop.f32.mrb[0].mxu0
        %v910 = vadd.f32 %v838, %v909
        %v911 = vpop.f32.mrb[0].mxu0
        %v912 = vadd.f32 %v838, %v911
        %913 = vdwg.mxu0
        %v916 = vrot.slane %v910, 7
        %v917 = vrot.slane %v912, 7
        %v920 = vsub.f32 %v910, %v916
        %v921 = vsub.f32 %v912, %v917
        %v922 = vmul.f32 %v920, 1.442695
        %v923 = vpow.pop %v922
        %v924 = vmul.f32 %v921, 1.442695
        %v925 = vpow.pop %v924
        %v926 = vadd.f32 %v923, 1.0
        %v927 = vadd.f32 %v925, 1.0
        %v928 = vrcp.pop %v926
        %v929 = vmul.f32 1.0, %v928
        %v930 = vrcp.pop %v927
        %v931 = vmul.f32 1.0, %v930
        %v932 = vsub.f32 %v321, %v322
        %v933 = vlaneseq
        %v934 = vshrl.u32 %v933, 7
        %v935 = vsub.s32 1, %v934
        %v936 = vrot.slane %v929, %v935
        %v937 = vlaneseq
        %v938 = vshrl.u32 %v937, 7
        %v939 = vsub.s32 1, %v938
        %v940 = vrot.slane %v931, %v939
        %v942 = vcombine.high %v932, %v932
        %v944 = vmul.f32 %v936, %v932
        %v945 = vmul.f32 %v940, %v942
        %v948 = vcombine.low %v944, %v945
        %v950 = vadd.f32 %v322, %v948
        %951 = vst [vmem:[%s317] sm:$0xff] %v950
        %s952 = sand.u32 %s149, 1
        %s953 = scalar_lea.sflag [#allocation4], %s952
        %s954 = sand.u32 %s149, 1
        %s955 = smul.addr %s954, 8
        %s956 = scalar_lea.vmem [#allocation11], %s955
        // Predicated region
        $region61: #{tpu_custom_call.1} parent=39 // pred_check
          %p957 = pneg %p159
        $region62: #{tpu_custom_call.1} parent=39 // pred_check_branch
          %959 = sbr.rel (%p957) target = $region64
        $region63: #{tpu_custom_call.1} parent=39 // pred_region
          %s960 = smul.u32 2, %s26
          %s962 = ssub.s32 128, 128
          %963 = vsyncadd %s953, %s962
          %s964 = smul.addr %s960, 64
          %s965 = scalar_lea.hbm %s5, %s964
          %s967 = sshll.u32 %s956, 4
          %s968 = int_to_ptr.vmem [resolvable:$true] %s967
          %970 = dma.vmem_to_hbm [thread:$0]  %s968, 128, %s965, %s953
        $region64: #{tpu_custom_call.1} parent=39 // pred_fallthru
          _
      $region40: #{tpu_custom_call.1} parent=5 // pred_fallthru
        _
      %p971 = scmp.le.s32.totalorder 2, %s21
      // Predicated region
      $region65: #{tpu_custom_call.1} parent=5 // pred_check
        %p972 = pneg %p971
      $region66: #{tpu_custom_call.1} parent=5 // pred_check_branch
        %974 = sbr.rel (%p972) target = $region68
      $region67: #{tpu_custom_call.1} parent=5 // pred_region
        %s975 = ssub.s32 %s21, 2
        // Predicated region
        $region69: #{tpu_custom_call.1} parent=67 // pred_check
          %p976 = pneg %p165
        $region70: #{tpu_custom_call.1} parent=67 // pred_check_branch
          %978 = sbr.rel (%p976) target = $region72
        $region71: #{tpu_custom_call.1} parent=67 // pred_region
          %s979 = sand.u32 %s150, 1
          %s980 = scalar_lea.sflag [#allocation4], %s979
          %s981 = sand.u32 %s150, 1
          %s982 = smul.addr %s981, 8
          %s983 = scalar_lea.vmem [#allocation11], %s982
          %984 = dma.done %s980, 128
        $region72: #{tpu_custom_call.1} parent=67 // pred_fallthru
          _
      $region68: #{tpu_custom_call.1} parent=5 // pred_fallthru
        _
    $region6: #{tpu_custom_call.1} parent=1 // loop_footer
      %s25 = sadd.s32 1, %s21
    $region7: #{tpu_custom_call.1} parent=1 // loop_footer_branch
      %20 = sbr.rel target = $region3
    $region8: #{tpu_custom_call.1} parent=1 // loop_exit
      _
    %985 = vsyncpa [#allocation3], 1
    %s986 = scalar_lea.sflag [#allocation3], 1
    %987 = vsyncpa %s986, 1
    %988 = vsyncpa [#allocation6], 1
    %s989 = scalar_lea.sflag [#allocation6], 1
    %990 = vsyncpa %s989, 1
    %991 = vsyncpa [#allocation9], 1
    %992 = vsyncpa [#allocation4], 1
    %s993 = scalar_lea.sflag [#allocation4], 1
    %994 = vsyncpa %s993, 1

</llo_original>
